<compile_context>
chip_gen: v7x
topology: tpu7x:2x2x1
jax: 0.10.0
libtpu: 0.0.40
codegen_flags: <defaults>
</compile_context>

<pallas_src>
import numpy as np
import jax
import jax.numpy as jnp
from jax.experimental import pallas as pl
from jax.experimental.pallas import tpu as pltpu


def _round_up(x, m):
    return -(-int(x) // int(m)) * int(m)


def _auto_compute_dtype():
    """bf16 elementwise only where the VPU/EUP are bf16-native (v6e / v7x)."""
    try:
        kind = jax.devices()[0].device_kind.lower()
    except Exception:
        return jnp.float32
    if any(tag in kind for tag in ("v6", "v7", "7x")):
        return jnp.bfloat16
    return jnp.float32


def _make_cost_kernel(cost_class, cost_bbox, cost_giou, compute_dtype):
    cdt = compute_dtype

    def cost_kernel(logits_ref, boxes_ref, onehot_ref, tgt_t_ref, out_ref):
        # ---- classification cost: -cost_class * softmax(logits)[:, tgt_ids]
        # Softmax normalization is deferred and fused with (-cost_class) into a single
        # [TN,1] scale -> one broadcast-multiply on the [TN,T] tile.
        logits = logits_ref[...].astype(jnp.float32)                    # [TN, C]
        m = jnp.max(logits, axis=-1, keepdims=True)
        e = jnp.exp(logits - m)                                         # [TN, C]
        scale = (-cost_class) * pl.reciprocal(
            jnp.sum(e, axis=-1, keepdims=True), approx=True)            # [TN, 1]
        # bf16 MXU operands (one-hot arrives as bf16), f32 accumulate.
        cost = jnp.dot(e.astype(jnp.bfloat16), onehot_ref[...],
                       preferred_element_type=jnp.float32) * scale      # [TN, T] f32

        # ---- box coordinates in the compute dtype (bf16 => packed VALU on v6e/v7x)
        b = boxes_ref[...].astype(cdt)                                  # [TN, 4]
        ocx, ocy, ow, oh = b[:, 0:1], b[:, 1:2], b[:, 2:3], b[:, 3:4]   # [TN, 1]
        t = tgt_t_ref[...].astype(cdt)                                  # [4, T]
        tcx, tcy, tw, th = t[0:1], t[1:2], t[2:3], t[3:4]               # [1, T]

        # ---- L1 cost on (cx, cy, w, h): torch.cdist(out_bbox, tgt_bbox, p=1)
        c_bbox = (jnp.abs(ocx - tcx) + jnp.abs(ocy - tcy)
                  + jnp.abs(ow - tw) + jnp.abs(oh - th))                # [TN, T]
        cost = cost + cost_bbox * c_bbox                                # f32 accumulate

        # ---- GIoU cost on xyxy boxes;  -giou == (earea - union)/earea - iou
        ox0, ox1 = ocx - 0.5 * ow, ocx + 0.5 * ow
        oy0, oy1 = ocy - 0.5 * oh, ocy + 0.5 * oh
        tx0, tx1 = tcx - 0.5 * tw, tcx + 0.5 * tw
        ty0, ty1 = tcy - 0.5 * th, tcy + 0.5 * th

        area_o = ((ox1 - ox0) * (oy1 - oy0)).astype(jnp.float32)        # [TN, 1]
        area_t = ((tx1 - tx0) * (ty1 - ty0)).astype(jnp.float32)        # [1, T]
        iw = jnp.maximum(jnp.minimum(ox1, tx1) - jnp.maximum(ox0, tx0), 0.0)
        ih = jnp.maximum(jnp.minimum(oy1, ty1) - jnp.maximum(oy0, ty0), 0.0)
        inter = iw * ih                                                 # [TN, T] cdt
        union = area_o + area_t - inter                                 # f32 (promoted)
        iou = inter * pl.reciprocal(jnp.maximum(union, 1e-7), approx=True)
        ew = jnp.maximum(ox1, tx1) - jnp.minimum(ox0, tx0)
        eh = jnp.maximum(oy1, ty1) - jnp.minimum(oy0, ty0)
        earea = (ew * eh).astype(jnp.float32)                           # f32 for recip
        cost = cost + cost_giou * (
            (earea - union) * pl.reciprocal(jnp.maximum(earea, 1e-7), approx=True)
            - iou)

        out_ref[...] = cost.astype(out_ref.dtype)

    return cost_kernel


def matcher_cost_blocks(pred_logits, pred_boxes, tgt_ids, tgt_bbox, sizes,
                        cost_class=1.0, cost_bbox=1.0, cost_giou=1.0,
                        tile_n=512, compute_dtype=None):
    """Per-image (block-diagonal) matching costs.

    Returns C of shape [bs, num_queries, t_pad] in bfloat16; for image b only the
    first sizes[b] target columns are meaningful (padded columns carry zero one-hots
    and dummy unit boxes, and must be sliced off before assignment).
    """
    bs, nq, num_classes = pred_logits.shape
    sizes = [int(s) for s in sizes]
    assert len(sizes) == bs and sum(sizes) == int(tgt_bbox.shape[0])
    if compute_dtype is None:
        compute_dtype = _auto_compute_dtype()

    # ---- per-image padded target width: lane-dense multiple of 128 (unmasked vst)
    t_pad = max(128, _round_up(max(sizes) if sizes else 1, 128))

    # ---- query tiling: multiple of 16 (clean bf16 sublane packing); ensure >= 2 grid
    # steps when bs == 1 so both v7x TensorCores get work.
    nq_pad16 = _round_up(nq, 16)
    tn = max(16, min(_round_up(int(tile_n), 16), nq_pad16))
    if bs == 1 and nq_pad16 // tn < 2 and nq > 16:
        tn = max(16, _round_up(nq_pad16 // 2, 16))
    nq_pad = _round_up(nq, tn)

    logits3 = pred_logits           # model dtype passes through; kernel upcasts
    boxes3 = pred_boxes
    if nq_pad != nq:
        logits3 = jnp.pad(logits3, ((0, 0), (0, nq_pad - nq), (0, 0)))
        pad_boxes = jnp.broadcast_to(
            jnp.asarray([0.5, 0.5, 1.0, 1.0], boxes3.dtype),
            (bs, nq_pad - nq, 4))
        boxes3 = jnp.concatenate([boxes3, pad_boxes], axis=1)

    # ---- per-image one-hot / transposed target boxes, each padded to t_pad columns.
    # One-hot is built directly in bf16: single-pass MXU operand, half the DMA bytes.
    dummy_col = jnp.asarray([[0.5], [0.5], [1.0], [1.0]], jnp.float32)
    oh_blocks, tb_blocks = [], []
    off = 0
    for s in sizes:
        oh = jax.nn.one_hot(tgt_ids[off:off + s], num_classes,
                            dtype=jnp.bfloat16).T                        # [C, s]
        oh_blocks.append(jnp.pad(oh, ((0, 0), (0, t_pad - s))))
        tb = tgt_bbox[off:off + s].astype(jnp.float32).T                 # [4, s]
        if s < t_pad:
            tb = jnp.concatenate([tb, jnp.tile(dummy_col, (1, t_pad - s))], axis=1)
        tb_blocks.append(tb)
        off += s
    onehot = jnp.concatenate(oh_blocks, axis=1)                          # [C, bs*t_pad]
    tgt_t = jnp.concatenate(tb_blocks, axis=1)                           # [4, bs*t_pad]

    kernel = _make_cost_kernel(float(cost_class), float(cost_bbox),
                               float(cost_giou), compute_dtype)

    c = pl.pallas_call(
        kernel,
        # bf16 output: halves the HBM store and the device->host payload; the cost
        # matrix is ordering-only, so this is safe.
        out_shape=jax.ShapeDtypeStruct((bs, nq_pad, t_pad), jnp.bfloat16),
        grid=(bs, nq_pad // tn),
        in_specs=[
            pl.BlockSpec((None, tn, num_classes), lambda b, i: (b, i, 0)),
            pl.BlockSpec((None, tn, 4), lambda b, i: (b, i, 0)),
            # per-image operand blocks: re-fetched only when b changes; the default
            # double-buffering overlaps the b -> b+1 fetch with compute.
            pl.BlockSpec((num_classes, t_pad), lambda b, i: (0, b)),
            pl.BlockSpec((4, t_pad), lambda b, i: (0, b)),
        ],
        out_specs=pl.BlockSpec((None, tn, t_pad), lambda b, i: (b, i, 0)),
        compiler_params=pltpu.CompilerParams(
            dimension_semantics=("parallel", "parallel")),
    )(logits3, boxes3, onehot, tgt_t)

    return c[:, :nq, :]


# ---------------- host-side Hungarian (same role as scipy.linear_sum_assignment) ----
def _hungarian_min(cost):
    """Exact min-cost assignment for an (n x m) matrix with n <= m.
    Returns list of (row, col) pairs, one per row. (e-maxx / JV algorithm)"""
    n, m = cost.shape
    assert n <= m
    INF = float("inf")
    u = [0.0] * (n + 1)
    v = [0.0] * (m + 1)
    p = [0] * (m + 1)
    way = [0] * (m + 1)
    for i in range(1, n + 1):
        p[0] = i
        j0 = 0
        minv = [INF] * (m + 1)
        used = [False] * (m + 1)
        while True:
            used[j0] = True
            i0 = p[j0]
            delta = INF
            j1 = -1
            for j in range(1, m + 1):
                if not used[j]:
                    cur = cost[i0 - 1, j - 1] - u[i0] - v[j]
                    if cur < minv[j]:
                        minv[j] = cur
                        way[j] = j0
                    if minv[j] < delta:
                        delta = minv[j]
                        j1 = j
            for j in range(m + 1):
                if used[j]:
                    u[p[j]] += delta
                    v[j] -= delta
                else:
                    minv[j] -= delta
            j0 = j1
            if p[j0] == 0:
                break
        while True:
            j1 = way[j0]
            p[j0] = p[j1]
            j0 = j1
            if j0 == 0:
                break
    return [(p[j] - 1, j - 1) for j in range(1, m + 1) if p[j] != 0]


def linear_sum_assignment_np(cost):
    """scipy-compatible (row_ind, col_ind) for a rectangular cost matrix."""
    cost = np.asarray(cost, dtype=np.float64)
    nq, nt = cost.shape
    if nq >= nt:
        # transpose so rows (targets) <= cols (queries)
        pairs = _hungarian_min(cost.T)          # (target_row, query_col)
        pairs = sorted((q, t) for (t, q) in pairs)
    else:
        pairs = sorted(_hungarian_min(cost))
    rows = np.array([p[0] for p in pairs], dtype=np.int64)
    cols = np.array([p[1] for p in pairs], dtype=np.int64)
    return rows, cols


class HungarianMatcherPallas:
    """JAX/Pallas port of HungarianMatcher (loc_prior=False, scale_variance=False path)."""

    def __init__(self, soi, strides, loc_prior=False, scale_variance=False,
                 cost_class: float = 1, cost_bbox: float = 1, cost_giou: float = 1,
                 tile_n: int = 512, compute_dtype=None):
        assert len(soi) == len(strides)
        self.soi = soi
        self.strides = strides
        self.num_stage = len(soi)
        self.loc_prior = loc_prior
        self.scale_variance = scale_variance
        self.cost_class = cost_class
        self.cost_bbox = cost_bbox
        self.cost_giou = cost_giou
        self.tile_n = tile_n
        self.compute_dtype = compute_dtype
        assert cost_class != 0 or cost_bbox != 0 or cost_giou != 0
        # TODO(synk): loc_prior / scale_variance branches (center_prior + per-level
        # scale-aware matching) are not implemented; only the default cost path is.

    def forward(self, outputs, targets):
        bs, num_queries = outputs["pred_logits"].shape[:2]
        sizes = [int(v["boxes"].shape[0]) for v in targets]
        tgt_ids = jnp.concatenate([v["labels"] for v in targets])
        tgt_bbox = jnp.concatenate([v["boxes"] for v in targets])

        C = matcher_cost_blocks(outputs["pred_logits"], outputs["pred_boxes"],
                                tgt_ids, tgt_bbox, sizes,
                                cost_class=self.cost_class,
                                cost_bbox=self.cost_bbox,
                                cost_giou=self.cost_giou,
                                tile_n=self.tile_n,
                                compute_dtype=self.compute_dtype)
        # bf16 on the wire (half the D2H bytes); upcast on host for the assignment.
        C_host = np.asarray(jax.block_until_ready(C)).astype(np.float32)

        indices = [linear_sum_assignment_np(C_host[i, :, :s]) if s > 0
                   else (np.zeros(0, np.int64), np.zeros(0, np.int64))
                   for i, s in enumerate(sizes)]
        match_indices = [(jnp.asarray(i, dtype=jnp.int32), jnp.asarray(j, dtype=jnp.int32))
                         for i, j in indices]
        return match_indices, targets


# ---------------- reference (pure numpy) for a correctness check -------------------
def _cost_matrix_ref(pred_logits, pred_boxes, tgt_ids, tgt_bbox, wc, wb, wg):
    bs, nq, nc = pred_logits.shape
    logits = np.asarray(pred_logits, np.float64).reshape(bs * nq, nc)
    prob = np.exp(logits - logits.max(-1, keepdims=True))
    prob /= prob.sum(-1, keepdims=True)
    out_bbox = np.asarray(pred_boxes, np.float64).reshape(bs * nq, 4)
    tb = np.asarray(tgt_bbox, np.float64)
    ti = np.asarray(tgt_ids)

    c_class = -prob[:, ti]
    c_bbox = np.abs(out_bbox[:, None, :] - tb[None, :, :]).sum(-1)

    def to_xyxy(b):
        cx, cy, w, h = b[:, 0], b[:, 1], b[:, 2], b[:, 3]
        return np.stack([cx - 0.5 * w, cy - 0.5 * h, cx + 0.5 * w, cy + 0.5 * h], -1)

    a, b2 = to_xyxy(out_bbox), to_xyxy(tb)
    area_a = (a[:, 2] - a[:, 0]) * (a[:, 3] - a[:, 1])
    area_b = (b2[:, 2] - b2[:, 0]) * (b2[:, 3] - b2[:, 1])
    lt = np.maximum(a[:, None, :2], b2[None, :, :2])
    rb = np.minimum(a[:, None, 2:], b2[None, :, 2:])
    wh = np.clip(rb - lt, 0, None)
    inter = wh[..., 0] * wh[..., 1]
    union = area_a[:, None] + area_b[None, :] - inter
    iou = inter / union
    lt2 = np.minimum(a[:, None, :2], b2[None, :, :2])
    rb2 = np.maximum(a[:, None, 2:], b2[None, :, 2:])
    wh2 = np.clip(rb2 - lt2, 0, None)
    earea = wh2[..., 0] * wh2[..., 1]
    giou = iou - (earea - union) / earea
    c_giou = -giou
    C = wb * c_bbox + wc * c_class + wg * c_giou
    return C.reshape(bs, nq, -1)


if __name__ == "__main__":
    key = jax.random.PRNGKey(0)
    bs, num_queries, num_classes = 2, 64, 8
    sizes = [3, 5]   # targets per image
    tile_n = 32      # nq=64 -> 2 query tiles -> grid (2, 2): exercises the pipeline

    k1, k2, k3, k4 = jax.random.split(key, 4)
    pred_logits = jax.random.normal(k1, (bs, num_queries, num_classes), jnp.float32)
    # predicted boxes in (cx, cy, w, h), valid and normalized
    pred_boxes = jnp.concatenate(
        [jax.random.uniform(k2, (bs, num_queries, 2), minval=0.2, maxval=0.8),
         jax.random.uniform(k3, (bs, num_queries, 2), minval=0.05, maxval=0.3)],
        axis=-1).astype(jnp.float32)

    targets = []
    kk = k4
    for s in sizes:
        kk, ka, kb, kc = jax.random.split(kk, 4)
        boxes = jnp.concatenate(
            [jax.random.uniform(ka, (s, 2), minval=0.2, maxval=0.8),
             jax.random.uniform(kb, (s, 2), minval=0.05, maxval=0.3)],
            axis=-1).astype(jnp.float32)
        labels = jax.random.randint(kc, (s,), 0, num_classes, dtype=jnp.int32)
        targets.append({"labels": labels, "boxes": boxes})

    matcher = HungarianMatcherPallas(soi=[[0, 64], [64, 1e8]], strides=[8, 16],
                                     cost_class=1.0, cost_bbox=1.0, cost_giou=1.0,
                                     tile_n=tile_n)

    # run the Pallas cost kernel + host assignment (auto compute dtype for the chip)
    match_indices, targets_out = matcher.forward(
        {"pred_logits": pred_logits, "pred_boxes": pred_boxes}, targets)
    for i, j in match_indices:
        jax.block_until_ready(i)
        jax.block_until_ready(j)

    # ---- exact (f64) dense reference cost matrix
    tgt_ids = jnp.concatenate([v["labels"] for v in targets])
    tgt_bbox = jnp.concatenate([v["boxes"] for v in targets])
    C_ref = _cost_matrix_ref(pred_logits, pred_boxes, tgt_ids, tgt_bbox, 1.0, 1.0, 1.0)
    offs = np.concatenate([[0], np.cumsum(sizes)]).astype(np.int64)

    # (1) f32-internals path: tight check (bf16 output rounding + approx reciprocals)
    C_f32 = np.asarray(jax.block_until_ready(
        matcher_cost_blocks(pred_logits, pred_boxes, tgt_ids, tgt_bbox, sizes,
                            tile_n=tile_n,
                            compute_dtype=jnp.float32))).astype(np.float64)
    for b, s in enumerate(sizes):
        ref_b = C_ref[b][:, offs[b]:offs[b] + s]
        got_b = C_f32[b][:, :s]
        assert np.isfinite(got_b).all(), "non-finite values in cost matrix (f32 path)"
        assert np.allclose(got_b, ref_b, atol=3e-2, rtol=2e-2), \
            f"img {b}: max err {np.abs(got_b - ref_b).max()}"

    # (2) auto path (bf16 internals on v6e/v7x): loose value check; the cost matrix
    #     only needs to preserve ordering for the assignment.
    C_auto = np.asarray(jax.block_until_ready(
        matcher_cost_blocks(pred_logits, pred_boxes, tgt_ids, tgt_bbox, sizes,
                            tile_n=tile_n))).astype(np.float64)
    for b, s in enumerate(sizes):
        ref_b = C_ref[b][:, offs[b]:offs[b] + s]
        got_b = C_auto[b][:, :s]
        assert np.isfinite(got_b).all(), "non-finite values in cost matrix (auto path)"
        assert np.allclose(got_b, ref_b, atol=1.5e-1, rtol=1e-1), \
            f"img {b}: max err {np.abs(got_b - ref_b).max()}"

    # (3) assignment sanity: right count, and near-optimal on the exact reference
    #     costs (bound 2*s*eps follows from entrywise perturbation eps of the costs).
    for b, ((qi, ti), s) in enumerate(zip(match_indices, sizes)):
        assert len(qi) == len(ti) == min(num_queries, s)
        ref_b = C_ref[b][:, offs[b]:offs[b] + s]
        got_b = C_auto[b][:, :s]
        eps_b = float(np.abs(got_b - ref_b).max())
        opt_r, opt_c = linear_sum_assignment_np(ref_b)
        opt_cost = float(ref_b[opt_r, opt_c].sum())
        got_cost = float(ref_b[np.asarray(qi), np.asarray(ti)].sum())
        assert got_cost <= opt_cost + 2 * s * max(eps_b, 1e-3) + 1e-6, \
            (got_cost, opt_cost, eps_b)

    print("KERNEL_OK")
</pallas_src>

<mosaic_0001>
module attributes {stable_mosaic.version = 11 : i64} {
  func.func @cost_kernel(%arg0: i32, %arg1: i32, %arg2: memref<1x32x8xf32, #tpu.memory_space<vmem>>, %arg3: memref<1x32x4xf32, #tpu.memory_space<vmem>>, %arg4: memref<8x128xbf16, #tpu.memory_space<vmem>>, %arg5: memref<4x128xf32, #tpu.memory_space<vmem>>, %arg6: memref<1x32x128xbf16, #tpu.memory_space<vmem>>) attributes {dimension_semantics = [#tpu.dimension_semantics<parallel>, #tpu.dimension_semantics<parallel>], iteration_bounds = array<i64: 2, 2>, scalar_prefetch = 0 : i64, scratch_operands = 0 : i64, tpu.core_type = #tpu.core_type<tc>, window_params = [{transform_indices = @transform_0, window_bounds = array<i64: 1, 32, 8>}, {transform_indices = @transform_1, window_bounds = array<i64: 1, 32, 4>}, {transform_indices = @transform_2, window_bounds = array<i64: 8, 128>}, {transform_indices = @transform_3, window_bounds = array<i64: 4, 128>}, {transform_indices = @transform_4, window_bounds = array<i64: 1, 32, 128>}]} {
    %c0 = arith.constant 0 : index
    %c0_0 = arith.constant 0 : index
    %c0_1 = arith.constant 0 : index
    %0 = vector.load %arg2[%c0, %c0_0, %c0_1] : memref<1x32x8xf32, #tpu.memory_space<vmem>>, vector<1x32x8xf32>
    %1 = vector.shape_cast %0 : vector<1x32x8xf32> to vector<32x8xf32>
    %cst = arith.constant dense<0xFF800000> : vector<32xf32>
    %2 = vector.multi_reduction <maximumf>, %1, %cst [1] : vector<32x8xf32> to vector<32xf32>
    %3 = vector.shape_cast %2 : vector<32xf32> to vector<32x1xf32>
    %4 = vector.broadcast %3 : vector<32x1xf32> to vector<32x8xf32>
    %5 = arith.subf %1, %4 : vector<32x8xf32>
    %6 = math.exp %5 : vector<32x8xf32>
    %cst_2 = arith.constant dense<0.000000e+00> : vector<32xf32>
    %7 = vector.multi_reduction <add>, %6, %cst_2 [1] : vector<32x8xf32> to vector<32xf32>
    %8 = vector.shape_cast %7 : vector<32xf32> to vector<32x1xf32>
    %9 = tpu.reciprocal %8 {approx = true} : vector<32x1xf32> -> vector<32x1xf32>
    %cst_3 = arith.constant -1.000000e+00 : f32
    %10 = vector.broadcast %cst_3 : f32 to vector<32x1xf32>
    %11 = arith.mulf %10, %9 : vector<32x1xf32>
    %12 = arith.truncf %6 : vector<32x8xf32> to vector<32x8xbf16>
    %c0_4 = arith.constant 0 : index
    %c0_5 = arith.constant 0 : index
    %13 = vector.load %arg4[%c0_4, %c0_5] : memref<8x128xbf16, #tpu.memory_space<vmem>>, vector<8x128xbf16>
    %cst_6 = arith.constant dense<0.000000e+00> : vector<32x128xf32>
    %14 = tpu.matmul %12, %13, %cst_6 {dimension_numbers = #tpu.dot_dimension_numbers<[1], [0], [0], [1], [0, 0, 1, 1], [], []>} : vector<32x8xbf16>, vector<8x128xbf16>, vector<32x128xf32> -> vector<32x128xf32>
    %15 = vector.broadcast %11 : vector<32x1xf32> to vector<32x128xf32>
    %16 = arith.mulf %14, %15 : vector<32x128xf32>
    %c0_7 = arith.constant 0 : index
    %c0_8 = arith.constant 0 : index
    %c0_9 = arith.constant 0 : index
    %17 = vector.load %arg3[%c0_7, %c0_8, %c0_9] : memref<1x32x4xf32, #tpu.memory_space<vmem>>, vector<1x32x4xf32>
    %18 = vector.shape_cast %17 : vector<1x32x4xf32> to vector<32x4xf32>
    %19 = vector.extract_strided_slice %18 {offsets = [0, 0], sizes = [32, 1], strides = [1, 1]} : vector<32x4xf32> to vector<32x1xf32>
    %20 = vector.extract_strided_slice %18 {offsets = [0, 1], sizes = [32, 1], strides = [1, 1]} : vector<32x4xf32> to vector<32x1xf32>
    %21 = vector.extract_strided_slice %18 {offsets = [0, 2], sizes = [32, 1], strides = [1, 1]} : vector<32x4xf32> to vector<32x1xf32>
    %22 = vector.extract_strided_slice %18 {offsets = [0, 3], sizes = [32, 1], strides = [1, 1]} : vector<32x4xf32> to vector<32x1xf32>
    %c0_10 = arith.constant 0 : index
    %c0_11 = arith.constant 0 : index
    %23 = vector.load %arg5[%c0_10, %c0_11] : memref<4x128xf32, #tpu.memory_space<vmem>>, vector<4x128xf32>
    %24 = vector.extract_strided_slice %23 {offsets = [0, 0], sizes = [1, 128], strides = [1, 1]} : vector<4x128xf32> to vector<1x128xf32>
    %25 = vector.extract_strided_slice %23 {offsets = [1, 0], sizes = [1, 128], strides = [1, 1]} : vector<4x128xf32> to vector<1x128xf32>
    %26 = vector.extract_strided_slice %23 {offsets = [2, 0], sizes = [1, 128], strides = [1, 1]} : vector<4x128xf32> to vector<1x128xf32>
    %27 = vector.extract_strided_slice %23 {offsets = [3, 0], sizes = [1, 128], strides = [1, 1]} : vector<4x128xf32> to vector<1x128xf32>
    %28 = vector.broadcast %19 : vector<32x1xf32> to vector<32x128xf32>
    %29 = vector.broadcast %24 : vector<1x128xf32> to vector<32x128xf32>
    %30 = arith.subf %28, %29 : vector<32x128xf32>
    %31 = math.absf %30 : vector<32x128xf32>
    %32 = vector.broadcast %20 : vector<32x1xf32> to vector<32x128xf32>
    %33 = vector.broadcast %25 : vector<1x128xf32> to vector<32x128xf32>
    %34 = arith.subf %32, %33 : vector<32x128xf32>
    %35 = math.absf %34 : vector<32x128xf32>
    %36 = arith.addf %31, %35 : vector<32x128xf32>
    %37 = vector.broadcast %21 : vector<32x1xf32> to vector<32x128xf32>
    %38 = vector.broadcast %26 : vector<1x128xf32> to vector<32x128xf32>
    %39 = arith.subf %37, %38 : vector<32x128xf32>
    %40 = math.absf %39 : vector<32x128xf32>
    %41 = arith.addf %36, %40 : vector<32x128xf32>
    %42 = vector.broadcast %22 : vector<32x1xf32> to vector<32x128xf32>
    %43 = vector.broadcast %27 : vector<1x128xf32> to vector<32x128xf32>
    %44 = arith.subf %42, %43 : vector<32x128xf32>
    %45 = math.absf %44 : vector<32x128xf32>
    %46 = arith.addf %41, %45 : vector<32x128xf32>
    %cst_12 = arith.constant 1.000000e+00 : f32
    %47 = vector.broadcast %cst_12 : f32 to vector<32x128xf32>
    %48 = arith.mulf %47, %46 : vector<32x128xf32>
    %49 = arith.addf %16, %48 : vector<32x128xf32>
    %cst_13 = arith.constant 5.000000e-01 : f32
    %50 = vector.broadcast %cst_13 : f32 to vector<32x1xf32>
    %51 = arith.mulf %50, %21 : vector<32x1xf32>
    %52 = arith.subf %19, %51 : vector<32x1xf32>
    %cst_14 = arith.constant 5.000000e-01 : f32
    %53 = vector.broadcast %cst_14 : f32 to vector<32x1xf32>
    %54 = arith.mulf %53, %21 : vector<32x1xf32>
    %55 = arith.addf %19, %54 : vector<32x1xf32>
    %cst_15 = arith.constant 5.000000e-01 : f32
    %56 = vector.broadcast %cst_15 : f32 to vector<32x1xf32>
    %57 = arith.mulf %56, %22 : vector<32x1xf32>
    %58 = arith.subf %20, %57 : vector<32x1xf32>
    %cst_16 = arith.constant 5.000000e-01 : f32
    %59 = vector.broadcast %cst_16 : f32 to vector<32x1xf32>
    %60 = arith.mulf %59, %22 : vector<32x1xf32>
    %61 = arith.addf %20, %60 : vector<32x1xf32>
    %cst_17 = arith.constant 5.000000e-01 : f32
    %62 = vector.broadcast %cst_17 : f32 to vector<1x128xf32>
    %63 = arith.mulf %62, %26 : vector<1x128xf32>
    %64 = arith.subf %24, %63 : vector<1x128xf32>
    %cst_18 = arith.constant 5.000000e-01 : f32
    %65 = vector.broadcast %cst_18 : f32 to vector<1x128xf32>
    %66 = arith.mulf %65, %26 : vector<1x128xf32>
    %67 = arith.addf %24, %66 : vector<1x128xf32>
    %cst_19 = arith.constant 5.000000e-01 : f32
    %68 = vector.broadcast %cst_19 : f32 to vector<1x128xf32>
    %69 = arith.mulf %68, %27 : vector<1x128xf32>
    %70 = arith.subf %25, %69 : vector<1x128xf32>
    %cst_20 = arith.constant 5.000000e-01 : f32
    %71 = vector.broadcast %cst_20 : f32 to vector<1x128xf32>
    %72 = arith.mulf %71, %27 : vector<1x128xf32>
    %73 = arith.addf %25, %72 : vector<1x128xf32>
    %74 = arith.subf %55, %52 : vector<32x1xf32>
    %75 = arith.subf %61, %58 : vector<32x1xf32>
    %76 = arith.mulf %74, %75 : vector<32x1xf32>
    %77 = arith.subf %67, %64 : vector<1x128xf32>
    %78 = arith.subf %73, %70 : vector<1x128xf32>
    %79 = arith.mulf %77, %78 : vector<1x128xf32>
    %80 = vector.broadcast %55 : vector<32x1xf32> to vector<32x128xf32>
    %81 = vector.broadcast %67 : vector<1x128xf32> to vector<32x128xf32>
    %82 = arith.minimumf %80, %81 : vector<32x128xf32>
    %83 = vector.broadcast %52 : vector<32x1xf32> to vector<32x128xf32>
    %84 = vector.broadcast %64 : vector<1x128xf32> to vector<32x128xf32>
    %85 = arith.maximumf %83, %84 : vector<32x128xf32>
    %86 = arith.subf %82, %85 : vector<32x128xf32>
    %cst_21 = arith.constant 0.000000e+00 : f32
    %87 = vector.broadcast %cst_21 : f32 to vector<32x128xf32>
    %88 = arith.maximumf %86, %87 : vector<32x128xf32>
    %89 = vector.broadcast %61 : vector<32x1xf32> to vector<32x128xf32>
    %90 = vector.broadcast %73 : vector<1x128xf32> to vector<32x128xf32>
    %91 = arith.minimumf %89, %90 : vector<32x128xf32>
    %92 = vector.broadcast %58 : vector<32x1xf32> to vector<32x128xf32>
    %93 = vector.broadcast %70 : vector<1x128xf32> to vector<32x128xf32>
    %94 = arith.maximumf %92, %93 : vector<32x128xf32>
    %95 = arith.subf %91, %94 : vector<32x128xf32>
    %cst_22 = arith.constant 0.000000e+00 : f32
    %96 = vector.broadcast %cst_22 : f32 to vector<32x128xf32>
    %97 = arith.maximumf %95, %96 : vector<32x128xf32>
    %98 = arith.mulf %88, %97 : vector<32x128xf32>
    %99 = vector.broadcast %76 : vector<32x1xf32> to vector<32x128xf32>
    %100 = vector.broadcast %79 : vector<1x128xf32> to vector<32x128xf32>
    %101 = arith.addf %99, %100 : vector<32x128xf32>
    %102 = arith.subf %101, %98 : vector<32x128xf32>
    %cst_23 = arith.constant 1.000000e-07 : f32
    %103 = vector.broadcast %cst_23 : f32 to vector<32x128xf32>
    %104 = arith.maximumf %102, %103 : vector<32x128xf32>
    %105 = tpu.reciprocal %104 {approx = true} : vector<32x128xf32> -> vector<32x128xf32>
    %106 = arith.mulf %98, %105 : vector<32x128xf32>
    %107 = vector.broadcast %55 : vector<32x1xf32> to vector<32x128xf32>
    %108 = vector.broadcast %67 : vector<1x128xf32> to vector<32x128xf32>
    %109 = arith.maximumf %107, %108 : vector<32x128xf32>
    %110 = vector.broadcast %52 : vector<32x1xf32> to vector<32x128xf32>
    %111 = vector.broadcast %64 : vector<1x128xf32> to vector<32x128xf32>
    %112 = arith.minimumf %110, %111 : vector<32x128xf32>
    %113 = arith.subf %109, %112 : vector<32x128xf32>
    %114 = vector.broadcast %61 : vector<32x1xf32> to vector<32x128xf32>
    %115 = vector.broadcast %73 : vector<1x128xf32> to vector<32x128xf32>
    %116 = arith.maximumf %114, %115 : vector<32x128xf32>
    %117 = vector.broadcast %58 : vector<32x1xf32> to vector<32x128xf32>
    %118 = vector.broadcast %70 : vector<1x128xf32> to vector<32x128xf32>
    %119 = arith.minimumf %117, %118 : vector<32x128xf32>
    %120 = arith.subf %116, %119 : vector<32x128xf32>
    %121 = arith.mulf %113, %120 : vector<32x128xf32>
    %122 = arith.subf %121, %102 : vector<32x128xf32>
    %cst_24 = arith.constant 1.000000e-07 : f32
    %123 = vector.broadcast %cst_24 : f32 to vector<32x128xf32>
    %124 = arith.maximumf %121, %123 : vector<32x128xf32>
    %125 = tpu.reciprocal %124 {approx = true} : vector<32x128xf32> -> vector<32x128xf32>
    %126 = arith.mulf %122, %125 : vector<32x128xf32>
    %127 = arith.subf %126, %106 : vector<32x128xf32>
    %cst_25 = arith.constant 1.000000e+00 : f32
    %128 = vector.broadcast %cst_25 : f32 to vector<32x128xf32>
    %129 = arith.mulf %128, %127 : vector<32x128xf32>
    %130 = arith.addf %49, %129 : vector<32x128xf32>
    %131 = arith.truncf %130 : vector<32x128xf32> to vector<32x128xbf16>
    %c0_26 = arith.constant 0 : index
    %c0_27 = arith.constant 0 : index
    %c0_28 = arith.constant 0 : index
    %132 = vector.load %arg6[%c0_26, %c0_27, %c0_28] : memref<1x32x128xbf16, #tpu.memory_space<vmem>>, vector<1x32x128xbf16>
    %133 = vector.shape_cast %132 : vector<1x32x128xbf16> to vector<32x128xbf16>
    %134 = vector.shape_cast %131 : vector<32x128xbf16> to vector<1x32x128xbf16>
    tpu.vector_store %arg6[%c0_26, %c0_27, %c0_28], %134 {strides = array<i32>} : memref<1x32x128xbf16, #tpu.memory_space<vmem>>, vector<1x32x128xbf16>,
    return
  }
  func.func @transform_0(%arg0: i32, %arg1: i32) -> (i32, i32, i32) {
    %c0_i32 = arith.constant 0 : i32
    %c0_i32_0 = arith.constant 0 : i32
    return %arg0, %arg1, %c0_i32 : i32, i32, i32
  }
  func.func @transform_1(%arg0: i32, %arg1: i32) -> (i32, i32, i32) {
    %c0_i32 = arith.constant 0 : i32
    %c0_i32_0 = arith.constant 0 : i32
    return %arg0, %arg1, %c0_i32 : i32, i32, i32
  }
  func.func @transform_2(%arg0: i32, %arg1: i32) -> (i32, i32) {
    %c0_i32 = arith.constant 0 : i32
    %c0_i32_0 = arith.constant 0 : i32
    return %c0_i32, %arg0 : i32, i32
  }
  func.func @transform_3(%arg0: i32, %arg1: i32) -> (i32, i32) {
    %c0_i32 = arith.constant 0 : i32
    %c0_i32_0 = arith.constant 0 : i32
    return %c0_i32, %arg0 : i32, i32
  }
  func.func @transform_4(%arg0: i32, %arg1: i32) -> (i32, i32, i32) {
    %c0_i32 = arith.constant 0 : i32
    %c0_i32_0 = arith.constant 0 : i32
    return %arg0, %arg1, %c0_i32 : i32, i32, i32
  }
}

</mosaic_0001>

<llo_original>
// kernel: tpu_custom_call.1
$region0: #{tpu_custom_call.1}
  #allocation0 [shape = 'u32[]', space=smem, size = 0x4, offset = 0x4, fixed_abs, tag = 'smem constant byte address 0x4 - core index']
  #allocation1 [shape = 'u32[144,128]{1,0:T(1,128)}', space=vmem, size = 0x12000, scoped, tag = 'internal scratch']
  %s0 = inlined_call_operand.vmem [shape: f32[2,64,8], index: 0, kind: input, shape index: {}]
  %s1 = inlined_call_operand.vmem [shape: f32[2,64,4], index: 1, kind: input, shape index: {}]
  %s2 = inlined_call_operand.vmem [shape: bf16[8,256], index: 2, kind: input, shape index: {}]
  %s3 = inlined_call_operand.vmem [shape: f32[4,256], index: 3, kind: input, shape index: {}]
  %s4 = inlined_call_operand.hbm [shape: bf16[2,64,128], index: 4, kind: output, shape index: {}]
  %s5 = sld [smem:[#allocation0]]
  $region49: #{tpu_custom_call.1} parent=0
    _
  %s7 = ssub.s32 1, %s5
  %s8 = scalar_select 0, %s7, %s5
  $region1: #{tpu_custom_call.1} parent=0
    #allocation2 [shape = 'u8[16384]{0}', space=vmem, size = 0x4000, scoped, tag = 'output window, operand 0']
    #allocation3 [shape = 's32[2]{0}', space=sflag, size = 0x8, scoped, tag = 'scoped memory for tpu_custom_call.1']
    %9 = vsyncpa [#allocation3], 0
    %s10 = scalar_lea.sflag [#allocation3], 1
    %11 = vsyncpa %s10, 0
    loop: start=0, step=1, limit=6
    $region2: #{tpu_custom_call.1} parent=1 // loop_pre_header
      _
    $region3: #{tpu_custom_call.1} parent=1 // loop_header
      %s13 = sphi 0, %s17
      %p14 = scmp.ge.s32.totalorder %s13, 6
      %s20 = sphi 0, %s32
      %s21 = sphi 0, %s28
      %s22 = sphi 0, %s20
      %s23 = sphi 0, %s21
      %s24 = sphi 0, %s22
      %s25 = sphi 0, %s23
      %s37 = sphi 0, %s39
      %s40 = sphi 0, %s37
      %s41 = sphi 0, %s40
      %s57 = sphi 0, %s41
      %s65 = sphi 0, %s67
      %s68 = sphi 0, %s65
      %s69 = sphi 0, %s68
      %s85 = sphi 0, %s69
      %s91 = sphi 0, %s93
      %s94 = sphi 0, %s91
      %s95 = sphi 0, %s94
      %s111 = sphi 0, %s95
      %s117 = sphi 0, %s119
      %s120 = sphi 0, %s117
      %s121 = sphi 0, %s120
      %s137 = sphi 0, %s121
      %s145 = sphi 0, %s147
      %s148 = sphi 0, %s145
      %s149 = sphi 0, %s148
      %s165 = sphi 0, %s149
    $region4: #{tpu_custom_call.1} parent=1 // loop_header_branch
      %16 = sbr.rel (%p14) target = $region8
    $region5: #{tpu_custom_call.1} parent=1 // loop_body
      %s18 = ssub.s32 %s13, 1
      %s19 = ssub.s32 %s13, 2
      %s26 = sadd.s32 1, %s21
      %p27 = scmp.ge.s32.totalorder %s26, 2
      %s28 = scalar_select %p27, 0, %s26
      %s29 = sadd.s32 1, %s20
      %s30 = scalar_select %p27, %s29, %s20
      %p31 = scmp.ge.s32.totalorder %s30, 2
      %s32 = scalar_select %p31, 0, %s30
      %s33 = ssub.s32 %s20, %s32
      %s34 = ssub.s32 %s21, %s28
      %s35 = sor.u32 %s33, %s34
      %p36 = scmp.eq.s32.totalorder %s35, 0
      %s38 = sadd.s32 %s37, 1
      %s39 = scalar_select %p36, %s37, %s38
      %p42 = pneg %p36
      %p43 = scmp.eq.s32.totalorder %s13, 3
      %p44 = por %p42, %p43
      %p45 = scmp.ne.s32.totalorder %s37, %s40
      %p46 = scmp.eq.s32.totalorder %s13, 0
      %p47 = por %p45, %p46
      %p48 = scmp.ne.s32.totalorder %s37, %s40
      %p49 = scmp.eq.s32.totalorder %s18, 3
      %p50 = por %p48, %p49
      %p51 = scmp.ne.s32.totalorder %s40, %s41
      %p52 = scmp.eq.s32.totalorder %s18, 0
      %p53 = por %p51, %p52
      %p54 = scmp.ne.s32.totalorder %s40, %s41
      %p55 = scmp.eq.s32.totalorder %s19, 3
      %p56 = por %p54, %p55
      %p58 = scmp.ne.s32.totalorder %s41, %s57
      %p59 = scmp.eq.s32.totalorder %s19, 0
      %p60 = por %p58, %p59
      %s61 = ssub.s32 %s20, %s32
      %s62 = ssub.s32 %s21, %s28
      %s63 = sor.u32 %s61, %s62
      %p64 = scmp.eq.s32.totalorder %s63, 0
      %s66 = sadd.s32 %s65, 1
      %s67 = scalar_select %p64, %s65, %s66
      %p70 = pneg %p64
      %p71 = scmp.eq.s32.totalorder %s13, 3
      %p72 = por %p70, %p71
      %p73 = scmp.ne.s32.totalorder %s65, %s68
      %p74 = scmp.eq.s32.totalorder %s13, 0
      %p75 = por %p73, %p74
      %p76 = scmp.ne.s32.totalorder %s65, %s68
      %p77 = scmp.eq.s32.totalorder %s18, 3
      %p78 = por %p76, %p77
      %p79 = scmp.ne.s32.totalorder %s68, %s69
      %p80 = scmp.eq.s32.totalorder %s18, 0
      %p81 = por %p79, %p80
      %p82 = scmp.ne.s32.totalorder %s68, %s69
      %p83 = scmp.eq.s32.totalorder %s19, 3
      %p84 = por %p82, %p83
      %p86 = scmp.ne.s32.totalorder %s69, %s85
      %p87 = scmp.eq.s32.totalorder %s19, 0
      %p88 = por %p86, %p87
      %s89 = ssub.s32 %s20, %s32
      %p90 = scmp.eq.s32.totalorder %s89, 0
      %s92 = sadd.s32 %s91, 1
      %s93 = scalar_select %p90, %s91, %s92
      %p96 = pneg %p90
      %p97 = scmp.eq.s32.totalorder %s13, 3
      %p98 = por %p96, %p97
      %p99 = scmp.ne.s32.totalorder %s91, %s94
      %p100 = scmp.eq.s32.totalorder %s13, 0
      %p101 = por %p99, %p100
      %p102 = scmp.ne.s32.totalorder %s91, %s94
      %p103 = scmp.eq.s32.totalorder %s18, 3
      %p104 = por %p102, %p103
      %p105 = scmp.ne.s32.totalorder %s94, %s95
      %p106 = scmp.eq.s32.totalorder %s18, 0
      %p107 = por %p105, %p106
      %p108 = scmp.ne.s32.totalorder %s94, %s95
      %p109 = scmp.eq.s32.totalorder %s19, 3
      %p110 = por %p108, %p109
      %p112 = scmp.ne.s32.totalorder %s95, %s111
      %p113 = scmp.eq.s32.totalorder %s19, 0
      %p114 = por %p112, %p113
      %s115 = ssub.s32 %s20, %s32
      %p116 = scmp.eq.s32.totalorder %s115, 0
      %s118 = sadd.s32 %s117, 1
      %s119 = scalar_select %p116, %s117, %s118
      %p122 = pneg %p116
      %p123 = scmp.eq.s32.totalorder %s13, 3
      %p124 = por %p122, %p123
      %p125 = scmp.ne.s32.totalorder %s117, %s120
      %p126 = scmp.eq.s32.totalorder %s13, 0
      %p127 = por %p125, %p126
      %p128 = scmp.ne.s32.totalorder %s117, %s120
      %p129 = scmp.eq.s32.totalorder %s18, 3
      %p130 = por %p128, %p129
      %p131 = scmp.ne.s32.totalorder %s120, %s121
      %p132 = scmp.eq.s32.totalorder %s18, 0
      %p133 = por %p131, %p132
      %p134 = scmp.ne.s32.totalorder %s120, %s121
      %p135 = scmp.eq.s32.totalorder %s19, 3
      %p136 = por %p134, %p135
      %p138 = scmp.ne.s32.totalorder %s121, %s137
      %p139 = scmp.eq.s32.totalorder %s19, 0
      %p140 = por %p138, %p139
      %s141 = ssub.s32 %s20, %s32
      %s142 = ssub.s32 %s21, %s28
      %s143 = sor.u32 %s141, %s142
      %p144 = scmp.eq.s32.totalorder %s143, 0
      %s146 = sadd.s32 %s145, 1
      %s147 = scalar_select %p144, %s145, %s146
      %p150 = pneg %p144
      %p151 = scmp.eq.s32.totalorder %s13, 3
      %p152 = por %p150, %p151
      %p153 = scmp.ne.s32.totalorder %s145, %s148
      %p154 = scmp.eq.s32.totalorder %s13, 0
      %p155 = por %p153, %p154
      %p156 = scmp.ne.s32.totalorder %s145, %s148
      %p157 = scmp.eq.s32.totalorder %s18, 3
      %p158 = por %p156, %p157
      %p159 = scmp.ne.s32.totalorder %s148, %s149
      %p160 = scmp.eq.s32.totalorder %s18, 0
      %p161 = por %p159, %p160
      %p162 = scmp.ne.s32.totalorder %s148, %s149
      %p163 = scmp.eq.s32.totalorder %s19, 3
      %p164 = por %p162, %p163
      %p166 = scmp.ne.s32.totalorder %s149, %s165
      %p167 = scmp.eq.s32.totalorder %s19, 0
      %p168 = por %p166, %p167
      %p169 = scmp.le.s32.totalorder 1, %s13
      %p170 = scmp.lt.s32.totalorder %s13, 5
      %p171 = pnand %p169, %p170
      %p172 = pneg %p171
      // Predicated region
      $region9: #{tpu_custom_call.1} parent=5 // pred_check
        _
      $region10: #{tpu_custom_call.1} parent=5 // pred_check_branch
        %174 = sbr.rel (%p171) target = $region12
      $region11: #{tpu_custom_call.1} parent=5 // pred_region
        %s175 = ssub.s32 %s13, 1
      $region12: #{tpu_custom_call.1} parent=5 // pred_fallthru
        _
      %p176 = scmp.lt.s32.totalorder %s13, 4
      // Predicated region
      $region13: #{tpu_custom_call.1} parent=5 // pred_check
        %p177 = pneg %p176
      $region14: #{tpu_custom_call.1} parent=5 // pred_check_branch
        %179 = sbr.rel (%p177) target = $region16
      $region15: #{tpu_custom_call.1} parent=5 // pred_region
        // Predicated region
        $region17: #{tpu_custom_call.1} parent=15 // pred_check
          %p180 = pneg %p47
        $region18: #{tpu_custom_call.1} parent=15 // pred_check_branch
          %182 = sbr.rel (%p180) target = $region20
        $region19: #{tpu_custom_call.1} parent=15 // pred_region
          %s183 = smul.u32 4, %s21
          %p184 = scmp.lt.s32.totalorder %s20, 1
          %s185 = scalar_select %p184, %s20, 1
          %p186 = scmp.lt.s32.totalorder %s183, 7
          %s187 = scalar_select %p186, %s183, 7
          %s188 = smul.addr %s185, 8
          %s189 = sadd.s32 %s187, %s188
          %s190 = smul.addr %s189, 8
          %s191 = scalar_lea.vmem %s0, %s190
          %s192 = smul.u32 4, %s21
        $region20: #{tpu_custom_call.1} parent=15 // pred_fallthru
          _
        // Predicated region
        $region21: #{tpu_custom_call.1} parent=15 // pred_check
          %p193 = pneg %p75
        $region22: #{tpu_custom_call.1} parent=15 // pred_check_branch
          %195 = sbr.rel (%p193) target = $region24
        $region23: #{tpu_custom_call.1} parent=15 // pred_region
          %s196 = smul.u32 4, %s21
          %p197 = scmp.lt.s32.totalorder %s20, 1
          %s198 = scalar_select %p197, %s20, 1
          %p199 = scmp.lt.s32.totalorder %s196, 7
          %s200 = scalar_select %p199, %s196, 7
          %s201 = smul.addr %s198, 8
          %s202 = sadd.s32 %s200, %s201
          %s203 = smul.addr %s202, 8
          %s204 = scalar_lea.vmem %s1, %s203
          %s205 = smul.u32 4, %s21
        $region24: #{tpu_custom_call.1} parent=15 // pred_fallthru
          _
        // Predicated region
        $region25: #{tpu_custom_call.1} parent=15 // pred_check
          %p206 = pneg %p101
        $region26: #{tpu_custom_call.1} parent=15 // pred_check_branch
          %208 = sbr.rel (%p206) target = $region28
        $region27: #{tpu_custom_call.1} parent=15 // pred_region
          %p209 = scmp.lt.s32.totalorder %s20, 1
          %s210 = scalar_select %p209, %s20, 1
          %s211 = smul.addr %s210, 4
          %s212 = scalar_lea.vmem %s2, %s211
        $region28: #{tpu_custom_call.1} parent=15 // pred_fallthru
          _
        // Predicated region
        $region29: #{tpu_custom_call.1} parent=15 // pred_check
          %p213 = pneg %p127
        $region30: #{tpu_custom_call.1} parent=15 // pred_check_branch
          %215 = sbr.rel (%p213) target = $region32
        $region31: #{tpu_custom_call.1} parent=15 // pred_region
          %p216 = scmp.lt.s32.totalorder %s20, 1
          %s217 = scalar_select %p216, %s20, 1
          %s218 = smul.addr %s217, 4
          %s219 = scalar_lea.vmem %s3, %s218
        $region32: #{tpu_custom_call.1} parent=15 // pred_fallthru
          _
      $region16: #{tpu_custom_call.1} parent=5 // pred_fallthru
        _
      %p220 = scmp.le.s32.totalorder 1, %s13
      %p221 = scmp.lt.s32.totalorder %s13, 5
      %p222 = pnand %p220, %p221
      %p223 = pneg %p222
      // Predicated region
      $region33: #{tpu_custom_call.1} parent=5 // pred_check
        _
      $region34: #{tpu_custom_call.1} parent=5 // pred_check_branch
        %225 = sbr.rel (%p222) target = $region36
      $region35: #{tpu_custom_call.1} parent=5 // pred_region
        %s226 = ssub.s32 %s13, 1
        %s227 = smul.u32 4, %s23
        %p228 = scmp.lt.s32.totalorder %s22, 1
        %s229 = scalar_select %p228, %s22, 1
        %p230 = scmp.lt.s32.totalorder %s227, 7
        %s231 = scalar_select %p230, %s227, 7
        %s232 = smul.addr %s229, 8
        %s233 = sadd.s32 %s231, %s232
        %s234 = smul.addr %s233, 8
        %s235 = scalar_lea.vmem %s0, %s234
        %p236 = pneg %p53
        %p237 = pneg %p50
        %s238 = smul.u32 4, %s23
        %p239 = scmp.lt.s32.totalorder %s22, 1
        %s240 = scalar_select %p239, %s22, 1
        %p241 = scmp.lt.s32.totalorder %s238, 7
        %s242 = scalar_select %p241, %s238, 7
        %s243 = smul.addr %s240, 8
        %s244 = sadd.s32 %s242, %s243
        %s245 = smul.addr %s244, 8
        %s246 = scalar_lea.vmem %s1, %s245
        %p247 = pneg %p81
        %p248 = pneg %p78
        %p249 = scmp.lt.s32.totalorder %s22, 1
        %s250 = scalar_select %p249, %s22, 1
        %s251 = smul.addr %s250, 4
        %s252 = scalar_lea.vmem %s2, %s251
        %p253 = pneg %p107
        %p254 = pneg %p104
        %p255 = scmp.lt.s32.totalorder %s22, 1
        %s256 = scalar_select %p255, %s22, 1
        %s257 = smul.addr %s256, 4
        %s258 = scalar_lea.vmem %s3, %s257
        %p259 = pneg %p133
        %p260 = pneg %p130
        %p261 = pneg %p161
        %p262 = pneg %p158
        %s263 = sand.u32 %s148, 1
        %s264 = scalar_lea.sflag [#allocation3], %s263
        %s265 = sand.u32 %s148, 1
        %s266 = smul.addr %s265, 16
        %s267 = scalar_lea.vmem [#allocation2], %s266
        %s268 = smul.u32 4, %s23
        %p269 = scmp.lt.s32.totalorder %s22, 1
        %s270 = scalar_select %p269, %s22, 1
        %p271 = scmp.lt.s32.totalorder %s268, 7
        %s272 = scalar_select %p271, %s268, 7
        %s273 = smul.addr %s270, 8
        %s274 = sadd.s32 %s272, %s273
        %s275 = smul.addr %s274, 8
        %s276 = scalar_lea.vmem %s0, %s275
        %s277 = smul.u32 4, %s23
        %s278 = smul.u32 4, %s23
        %p279 = scmp.lt.s32.totalorder %s22, 1
        %s280 = scalar_select %p279, %s22, 1
        %p281 = scmp.lt.s32.totalorder %s278, 7
        %s282 = scalar_select %p281, %s278, 7
        %s283 = smul.addr %s280, 8
        %s284 = sadd.s32 %s282, %s283
        %s285 = smul.addr %s284, 8
        %s286 = scalar_lea.vmem %s1, %s285
        %s287 = smul.u32 4, %s23
        %p288 = scmp.lt.s32.totalorder %s22, 1
        %s289 = scalar_select %p288, %s22, 1
        %s290 = smul.addr %s289, 4
        %s291 = scalar_lea.vmem %s2, %s290
        %p292 = scmp.lt.s32.totalorder %s22, 1
        %s293 = scalar_select %p292, %s22, 1
        %s294 = smul.addr %s293, 4
        %s295 = scalar_lea.vmem %s3, %s294
        %s296 = smul.u32 4, %s23
        %v298 = vld [vmem:[%s276] sm:$0xff]
        %v299 = vld [vmem:[%s276 + $0x8] sm:$0xff]
        %v300 = vld [vmem:[%s276 + $0x10] sm:$0xff]
        %v301 = vld [vmem:[%s276 + $0x18] sm:$0xff]
        %vm302 = vcmask 64512
        %v303 = vsel %vm302, %v298, -inf
        %304 = vmax.xlane.f32.xlu0 %v303
        %v305 = vpop.xlane.xlu0 %304
        %v306 = vsel %vm302, %v299, -inf
        %307 = vmax.xlane.f32.xlu0 %v306
        %v308 = vpop.xlane.xlu0 %307
        %v309 = vsel %vm302, %v300, -inf
        %310 = vmax.xlane.f32.xlu0 %v309
        %v311 = vpop.xlane.xlu0 %310
        %v312 = vsel %vm302, %v301, -inf
        %313 = vmax.xlane.f32.xlu0 %v312
        %v314 = vpop.xlane.xlu0 %313
        %v315 = vsub.f32 %v298, %v305
        %v316 = vsub.f32 %v299, %v308
        %v317 = vsub.f32 %v300, %v311
        %v318 = vsub.f32 %v301, %v314
        %v319 = vmul.f32 %v315, 1.442695
        %v320 = vpow.pop %v319
        %v321 = vmul.f32 %v316, 1.442695
        %v322 = vpow.pop %v321
        %v323 = vmul.f32 %v317, 1.442695
        %v324 = vpow.pop %v323
        %v325 = vmul.f32 %v318, 1.442695
        %v326 = vpow.pop %v325
        %v327 = vsel %vm302, %v320, 0.0
        %328 = vadd.xlane.f32.xlu0 %v327
        %v329 = vpop.xlane.xlu0 %328
        %v330 = vsel %vm302, %v322, 0.0
        %331 = vadd.xlane.f32.xlu0 %v330
        %v332 = vpop.xlane.xlu0 %331
        %v333 = vsel %vm302, %v324, 0.0
        %334 = vadd.xlane.f32.xlu0 %v333
        %v335 = vpop.xlane.xlu0 %334
        %v336 = vsel %vm302, %v326, 0.0
        %337 = vadd.xlane.f32.xlu0 %v336
        %v338 = vpop.xlane.xlu0 %337
        %v339 = vrcp.pop %v329
        %v340 = vrcp.pop %v332
        %v341 = vrcp.pop %v335
        %v342 = vrcp.pop %v338
        %v343 = vmul.f32 %v339, -1.0
        %v344 = vmul.f32 %v340, -1.0
        %v345 = vmul.f32 %v341, -1.0
        %v346 = vmul.f32 %v342, -1.0
        %v347 = vpack.c.bf16 %v322, %v320
        %v348 = vpack.c.bf16 %v326, %v324
        %v349 = vld [vmem:[%s291] sm:$0xf]
        %v351 = vsel %vm302, %v347, 0
        %v354 = vsel %vm302, %v348, 0
        %vm356 = vcmask 1043456
        %v358 = vsel %vm356, %v349, 0
        %360 = vmatprep.subr.bf16.mxu0 0
        %361 = vmatpush1.bf16.msra.mxu0 %v358
        %362 = vmatprep.subr.bf16.mxu0 0
        %363 = vmatpush1.bf16.msra.mxu0 0
        %364 = vmatprep.subr.bf16.mxu0 0
        %365 = vmatpush1.bf16.msra.mxu0 0
        %366 = vmatprep.subr.bf16.mxu0 0
        %367 = vmatpush1.bf16.msra.mxu0 0
        %368 = vmatprep.subr.bf16.mxu0 0
        %369 = vmatpush1.bf16.msra.mxu0 0
        %370 = vmatprep.subr.bf16.mxu0 0
        %371 = vmatpush1.bf16.msra.mxu0 0
        %372 = vmatprep.subr.bf16.mxu0 0
        %373 = vmatpush1.bf16.msra.mxu0 0
        %374 = vmatprep.subr.bf16.mxu0 0
        %375 = vmatpush1.bf16.msra.mxu0 0
        %376 = vmatprep.subr.bf16.mxu0 0
        %377 = vmatpush1.bf16.msra.mxu0 0
        %378 = vmatprep.subr.bf16.mxu0 0
        %379 = vmatpush1.bf16.msra.mxu0 0
        %380 = vmatprep.subr.bf16.mxu0 0
        %381 = vmatpush1.bf16.msra.mxu0 0
        %382 = vmatprep.subr.bf16.mxu0 0
        %383 = vmatpush1.bf16.msra.mxu0 0
        %384 = vmatprep.subr.bf16.mxu0 0
        %385 = vmatpush1.bf16.msra.mxu0 0
        %386 = vmatprep.subr.bf16.mxu0 0
        %387 = vmatpush1.bf16.msra.mxu0 0
        %388 = vmatprep.subr.bf16.mxu0 0
        %389 = vmatpush1.bf16.msra.mxu0 0
        %390 = vmatprep.subr.bf16.mxu0 0
        %391 = vmatpush1.bf16.msra.mxu0 0
        %392 = vmatprep.mubr.bf16.mxu0 0
        %393 = vmatmul.mubr.bf16.gmra.mrb[0].mxu0 %v351
        %v394 = vpop.f32.mrb[0].mxu0
        %v395 = vadd.f32 0.0, %v394
        %v396 = vpop.f32.mrb[0].mxu0
        %v397 = vpop.f32.mrb[0].mxu0
        %v398 = vadd.f32 0.0, %v397
        %v399 = vpop.f32.mrb[0].mxu0
        %400 = vmatprep.mubr.bf16.mxu0 0
        %401 = vmatmul.mubr.bf16.gmra.mrb[0].mxu0 %v354
        %v402 = vpop.f32.mrb[0].mxu0
        %v403 = vadd.f32 0.0, %v402
        %v404 = vpop.f32.mrb[0].mxu0
        %v405 = vpop.f32.mrb[0].mxu0
        %v406 = vadd.f32 0.0, %v405
        %v407 = vpop.f32.mrb[0].mxu0
        %408 = vdwg.mxu0
        %v409 = vmul.f32 %v395, %v343
        %v410 = vmul.f32 %v398, %v344
        %v411 = vmul.f32 %v403, %v345
        %v412 = vmul.f32 %v406, %v346
        %v413 = vld [vmem:[%s286] sm:$0xff]
        %v414 = vld [vmem:[%s286 + $0x8] sm:$0xff]
        %v415 = vld [vmem:[%s286 + $0x10] sm:$0xff]
        %v416 = vld [vmem:[%s286 + $0x18] sm:$0xff]
        %v417 = vld [vmem:[%s295] sm:$0xf]
        %419 = vset.pattern.permute.xlu0 0
        %420 = vperm.xlu0 %419, %v413
        %v421 = vpop.permute.xlu0 %420
        %424 = vset.pattern.permute.xlu0 0
        %425 = vperm.xlu0 %424, %v414
        %v426 = vpop.permute.xlu0 %425
        %429 = vset.pattern.permute.xlu0 0
        %430 = vperm.xlu0 %429, %v415
        %v431 = vpop.permute.xlu0 %430
        %434 = vset.pattern.permute.xlu0 0
        %435 = vperm.xlu0 %434, %v416
        %v436 = vpop.permute.xlu0 %435
        %v438 = vlaneseq
        %v439 = vshrl.u32 %v438, 7
        %v440 = vsub.s32 0, %v439
        %v441 = vrot.slane %v417, %v440
        %v442 = vsub.f32 %v421, %v441
        %v443 = vsub.f32 %v426, %v441
        %v444 = vsub.f32 %v431, %v441
        %v445 = vsub.f32 %v436, %v441
        %v446 = vand.u32 2147483647, %v442
        %v447 = vand.u32 2147483647, %v443
        %v448 = vand.u32 2147483647, %v444
        %v449 = vand.u32 2147483647, %v445
        %450 = vset.pattern.permute.xlu0 1
        %451 = vperm.xlu0 %450, %v413
        %v452 = vpop.permute.xlu0 %451
        %454 = vset.pattern.permute.xlu0 1
        %455 = vperm.xlu0 %454, %v414
        %v456 = vpop.permute.xlu0 %455
        %458 = vset.pattern.permute.xlu0 1
        %459 = vperm.xlu0 %458, %v415
        %v460 = vpop.permute.xlu0 %459
        %462 = vset.pattern.permute.xlu0 1
        %463 = vperm.xlu0 %462, %v416
        %v464 = vpop.permute.xlu0 %463
        %v466 = vlaneseq
        %v467 = vshrl.u32 %v466, 7
        %v468 = vsub.s32 1, %v467
        %v469 = vrot.slane %v417, %v468
        %v470 = vsub.f32 %v452, %v469
        %v471 = vsub.f32 %v456, %v469
        %v472 = vsub.f32 %v460, %v469
        %v473 = vsub.f32 %v464, %v469
        %v474 = vand.u32 2147483647, %v470
        %v475 = vand.u32 2147483647, %v471
        %v476 = vand.u32 2147483647, %v472
        %v477 = vand.u32 2147483647, %v473
        %v478 = vadd.f32 %v446, %v474
        %v479 = vadd.f32 %v447, %v475
        %v480 = vadd.f32 %v448, %v476
        %v481 = vadd.f32 %v449, %v477
        %482 = vset.pattern.permute.xlu0 2
        %483 = vperm.xlu0 %482, %v413
        %v484 = vpop.permute.xlu0 %483
        %486 = vset.pattern.permute.xlu0 2
        %487 = vperm.xlu0 %486, %v414
        %v488 = vpop.permute.xlu0 %487
        %490 = vset.pattern.permute.xlu0 2
        %491 = vperm.xlu0 %490, %v415
        %v492 = vpop.permute.xlu0 %491
        %494 = vset.pattern.permute.xlu0 2
        %495 = vperm.xlu0 %494, %v416
        %v496 = vpop.permute.xlu0 %495
        %v498 = vlaneseq
        %v499 = vshrl.u32 %v498, 7
        %v500 = vsub.s32 2, %v499
        %v501 = vrot.slane %v417, %v500
        %v502 = vsub.f32 %v484, %v501
        %v503 = vsub.f32 %v488, %v501
        %v504 = vsub.f32 %v492, %v501
        %v505 = vsub.f32 %v496, %v501
        %v506 = vand.u32 2147483647, %v502
        %v507 = vand.u32 2147483647, %v503
        %v508 = vand.u32 2147483647, %v504
        %v509 = vand.u32 2147483647, %v505
        %v510 = vadd.f32 %v478, %v506
        %v511 = vadd.f32 %v479, %v507
        %v512 = vadd.f32 %v480, %v508
        %v513 = vadd.f32 %v481, %v509
        %514 = vset.pattern.permute.xlu0 3
        %515 = vperm.xlu0 %514, %v413
        %v516 = vpop.permute.xlu0 %515
        %518 = vset.pattern.permute.xlu0 3
        %519 = vperm.xlu0 %518, %v414
        %v520 = vpop.permute.xlu0 %519
        %522 = vset.pattern.permute.xlu0 3
        %523 = vperm.xlu0 %522, %v415
        %v524 = vpop.permute.xlu0 %523
        %526 = vset.pattern.permute.xlu0 3
        %527 = vperm.xlu0 %526, %v416
        %v528 = vpop.permute.xlu0 %527
        %v530 = vlaneseq
        %v531 = vshrl.u32 %v530, 7
        %v532 = vsub.s32 3, %v531
        %v533 = vrot.slane %v417, %v532
        %v534 = vsub.f32 %v516, %v533
        %v535 = vsub.f32 %v520, %v533
        %v536 = vsub.f32 %v524, %v533
        %v537 = vsub.f32 %v528, %v533
        %v538 = vand.u32 2147483647, %v534
        %v539 = vand.u32 2147483647, %v535
        %v540 = vand.u32 2147483647, %v536
        %v541 = vand.u32 2147483647, %v537
        %v542 = vadd.f32 %v510, %v538
        %v543 = vadd.f32 %v511, %v539
        %v544 = vadd.f32 %v512, %v540
        %v545 = vadd.f32 %v513, %v541
        %v546 = vadd.f32 %v409, %v542
        %v547 = vadd.f32 %v410, %v543
        %v548 = vadd.f32 %v411, %v544
        %v549 = vadd.f32 %v412, %v545
        %v550 = vmul.f32 %v413, 0.5
        %v551 = vmul.f32 %v414, 0.5
        %v552 = vmul.f32 %v415, 0.5
        %v553 = vmul.f32 %v416, 0.5
        %558 = vrot.lane.b32.xlu0 %v550, 126
        %v559 = vpop.permute.xlu0 %558
        %560 = vrot.lane.b32.xlu0 %v551, 126
        %v561 = vpop.permute.xlu0 %560
        %562 = vrot.lane.b32.xlu0 %v552, 126
        %v563 = vpop.permute.xlu0 %562
        %564 = vrot.lane.b32.xlu0 %v553, 126
        %v565 = vpop.permute.xlu0 %564
        %v570 = vsub.f32 %v413, %v559
        %v571 = vsub.f32 %v414, %v561
        %v572 = vsub.f32 %v415, %v563
        %v573 = vsub.f32 %v416, %v565
        %v574 = vadd.f32 %v413, %v559
        %v575 = vadd.f32 %v414, %v561
        %v576 = vadd.f32 %v415, %v563
        %v577 = vadd.f32 %v416, %v565
        %v578 = vmul.f32 %v417, 0.5
        %v580 = vrot.slane %v578, 2
        %v582 = vsub.f32 %v417, %v580
        %v583 = vadd.f32 %v417, %v580
        %v584 = vsub.f32 %v574, %v570
        %v585 = vsub.f32 %v575, %v571
        %v586 = vsub.f32 %v576, %v572
        %v587 = vsub.f32 %v577, %v573
        %592 = vrot.lane.b32.xlu0 %v584, 127
        %v593 = vpop.permute.xlu0 %592
        %594 = vrot.lane.b32.xlu0 %v585, 127
        %v595 = vpop.permute.xlu0 %594
        %596 = vrot.lane.b32.xlu0 %v586, 127
        %v597 = vpop.permute.xlu0 %596
        %598 = vrot.lane.b32.xlu0 %v587, 127
        %v599 = vpop.permute.xlu0 %598
        %v604 = vmul.f32 %v584, %v593
        %v605 = vmul.f32 %v585, %v595
        %v606 = vmul.f32 %v586, %v597
        %v607 = vmul.f32 %v587, %v599
        %v608 = vsub.f32 %v583, %v582
        %v610 = vrot.slane %v608, 1
        %v612 = vmul.f32 %v608, %v610
        %614 = vset.pattern.permute.xlu0 0
        %615 = vperm.xlu0 %614, %v574
        %v616 = vpop.permute.xlu0 %615
        %619 = vset.pattern.permute.xlu0 0
        %620 = vperm.xlu0 %619, %v575
        %v621 = vpop.permute.xlu0 %620
        %624 = vset.pattern.permute.xlu0 0
        %625 = vperm.xlu0 %624, %v576
        %v626 = vpop.permute.xlu0 %625
        %629 = vset.pattern.permute.xlu0 0
        %630 = vperm.xlu0 %629, %v577
        %v631 = vpop.permute.xlu0 %630
        %v633 = vlaneseq
        %v634 = vshrl.u32 %v633, 7
        %v635 = vsub.s32 0, %v634
        %v636 = vrot.slane %v583, %v635
        %v637 = vmin.f32 %v616, %v636
        %v638 = vmin.f32 %v621, %v636
        %v639 = vmin.f32 %v626, %v636
        %v640 = vmin.f32 %v631, %v636
        %642 = vset.pattern.permute.xlu0 0
        %643 = vperm.xlu0 %642, %v570
        %v644 = vpop.permute.xlu0 %643
        %647 = vset.pattern.permute.xlu0 0
        %648 = vperm.xlu0 %647, %v571
        %v649 = vpop.permute.xlu0 %648
        %652 = vset.pattern.permute.xlu0 0
        %653 = vperm.xlu0 %652, %v572
        %v654 = vpop.permute.xlu0 %653
        %657 = vset.pattern.permute.xlu0 0
        %658 = vperm.xlu0 %657, %v573
        %v659 = vpop.permute.xlu0 %658
        %v661 = vlaneseq
        %v662 = vshrl.u32 %v661, 7
        %v663 = vsub.s32 0, %v662
        %v664 = vrot.slane %v582, %v663
        %v665 = vmax.f32 %v644, %v664
        %v666 = vmax.f32 %v649, %v664
        %v667 = vmax.f32 %v654, %v664
        %v668 = vmax.f32 %v659, %v664
        %v669 = vsub.f32 %v637, %v665
        %v670 = vsub.f32 %v638, %v666
        %v671 = vsub.f32 %v639, %v667
        %v672 = vsub.f32 %v640, %v668
        %v673 = vmax.f32 %v669, 0.0
        %v674 = vmax.f32 %v670, 0.0
        %v675 = vmax.f32 %v671, 0.0
        %v676 = vmax.f32 %v672, 0.0
        %677 = vset.pattern.permute.xlu0 1
        %678 = vperm.xlu0 %677, %v574
        %v679 = vpop.permute.xlu0 %678
        %681 = vset.pattern.permute.xlu0 1
        %682 = vperm.xlu0 %681, %v575
        %v683 = vpop.permute.xlu0 %682
        %685 = vset.pattern.permute.xlu0 1
        %686 = vperm.xlu0 %685, %v576
        %v687 = vpop.permute.xlu0 %686
        %689 = vset.pattern.permute.xlu0 1
        %690 = vperm.xlu0 %689, %v577
        %v691 = vpop.permute.xlu0 %690
        %v693 = vlaneseq
        %v694 = vshrl.u32 %v693, 7
        %v695 = vsub.s32 1, %v694
        %v696 = vrot.slane %v583, %v695
        %v697 = vmin.f32 %v679, %v696
        %v698 = vmin.f32 %v683, %v696
        %v699 = vmin.f32 %v687, %v696
        %v700 = vmin.f32 %v691, %v696
        %701 = vset.pattern.permute.xlu0 1
        %702 = vperm.xlu0 %701, %v570
        %v703 = vpop.permute.xlu0 %702
        %705 = vset.pattern.permute.xlu0 1
        %706 = vperm.xlu0 %705, %v571
        %v707 = vpop.permute.xlu0 %706
        %709 = vset.pattern.permute.xlu0 1
        %710 = vperm.xlu0 %709, %v572
        %v711 = vpop.permute.xlu0 %710
        %713 = vset.pattern.permute.xlu0 1
        %714 = vperm.xlu0 %713, %v573
        %v715 = vpop.permute.xlu0 %714
        %v717 = vlaneseq
        %v718 = vshrl.u32 %v717, 7
        %v719 = vsub.s32 1, %v718
        %v720 = vrot.slane %v582, %v719
        %v721 = vmax.f32 %v703, %v720
        %v722 = vmax.f32 %v707, %v720
        %v723 = vmax.f32 %v711, %v720
        %v724 = vmax.f32 %v715, %v720
        %v725 = vsub.f32 %v697, %v721
        %v726 = vsub.f32 %v698, %v722
        %v727 = vsub.f32 %v699, %v723
        %v728 = vsub.f32 %v700, %v724
        %v729 = vmax.f32 %v725, 0.0
        %v730 = vmax.f32 %v726, 0.0
        %v731 = vmax.f32 %v727, 0.0
        %v732 = vmax.f32 %v728, 0.0
        %v733 = vmul.f32 %v673, %v729
        %v734 = vmul.f32 %v674, %v730
        %v735 = vmul.f32 %v675, %v731
        %v736 = vmul.f32 %v676, %v732
        %738 = vset.pattern.permute.xlu0 0
        %739 = vperm.xlu0 %738, %v604
        %v740 = vpop.permute.xlu0 %739
        %743 = vset.pattern.permute.xlu0 0
        %744 = vperm.xlu0 %743, %v605
        %v745 = vpop.permute.xlu0 %744
        %748 = vset.pattern.permute.xlu0 0
        %749 = vperm.xlu0 %748, %v606
        %v750 = vpop.permute.xlu0 %749
        %753 = vset.pattern.permute.xlu0 0
        %754 = vperm.xlu0 %753, %v607
        %v755 = vpop.permute.xlu0 %754
        %v757 = vlaneseq
        %v758 = vshrl.u32 %v757, 7
        %v759 = vsub.s32 0, %v758
        %v760 = vrot.slane %v612, %v759
        %v761 = vadd.f32 %v740, %v760
        %v762 = vadd.f32 %v745, %v760
        %v763 = vadd.f32 %v750, %v760
        %v764 = vadd.f32 %v755, %v760
        %v765 = vsub.f32 %v761, %v733
        %v766 = vsub.f32 %v762, %v734
        %v767 = vsub.f32 %v763, %v735
        %v768 = vsub.f32 %v764, %v736
        %v769 = vmax.f32 %v765, 1e-07
        %v770 = vmax.f32 %v766, 1e-07
        %v771 = vmax.f32 %v767, 1e-07
        %v772 = vmax.f32 %v768, 1e-07
        %v773 = vrcp.pop %v769
        %v774 = vrcp.pop %v770
        %v775 = vrcp.pop %v771
        %v776 = vrcp.pop %v772
        %v777 = vmul.f32 %v733, %v773
        %v778 = vmul.f32 %v734, %v774
        %v779 = vmul.f32 %v735, %v775
        %v780 = vmul.f32 %v736, %v776
        %v781 = vmax.f32 %v616, %v636
        %v782 = vmax.f32 %v621, %v636
        %v783 = vmax.f32 %v626, %v636
        %v784 = vmax.f32 %v631, %v636
        %v785 = vmin.f32 %v644, %v664
        %v786 = vmin.f32 %v649, %v664
        %v787 = vmin.f32 %v654, %v664
        %v788 = vmin.f32 %v659, %v664
        %v789 = vsub.f32 %v781, %v785
        %v790 = vsub.f32 %v782, %v786
        %v791 = vsub.f32 %v783, %v787
        %v792 = vsub.f32 %v784, %v788
        %v793 = vmax.f32 %v679, %v696
        %v794 = vmax.f32 %v683, %v696
        %v795 = vmax.f32 %v687, %v696
        %v796 = vmax.f32 %v691, %v696
        %v797 = vmin.f32 %v703, %v720
        %v798 = vmin.f32 %v707, %v720
        %v799 = vmin.f32 %v711, %v720
        %v800 = vmin.f32 %v715, %v720
        %v801 = vsub.f32 %v793, %v797
        %v802 = vsub.f32 %v794, %v798
        %v803 = vsub.f32 %v795, %v799
        %v804 = vsub.f32 %v796, %v800
        %v805 = vmul.f32 %v789, %v801
        %v806 = vmul.f32 %v790, %v802
        %v807 = vmul.f32 %v791, %v803
        %v808 = vmul.f32 %v792, %v804
        %v809 = vsub.f32 %v805, %v765
        %v810 = vsub.f32 %v806, %v766
        %v811 = vsub.f32 %v807, %v767
        %v812 = vsub.f32 %v808, %v768
        %v813 = vmax.f32 %v805, 1e-07
        %v814 = vmax.f32 %v806, 1e-07
        %v815 = vmax.f32 %v807, 1e-07
        %v816 = vmax.f32 %v808, 1e-07
        %v817 = vrcp.pop %v813
        %v818 = vrcp.pop %v814
        %v819 = vrcp.pop %v815
        %v820 = vrcp.pop %v816
        %v821 = vmul.f32 %v809, %v817
        %v822 = vmul.f32 %v810, %v818
        %v823 = vmul.f32 %v811, %v819
        %v824 = vmul.f32 %v812, %v820
        %v825 = vsub.f32 %v821, %v777
        %v826 = vsub.f32 %v822, %v778
        %v827 = vsub.f32 %v823, %v779
        %v828 = vsub.f32 %v824, %v780
        %v829 = vadd.f32 %v546, %v825
        %v830 = vadd.f32 %v547, %v826
        %v831 = vadd.f32 %v548, %v827
        %v832 = vadd.f32 %v549, %v828
        %v833 = vpack.c.bf16 %v830, %v829
        %v834 = vpack.c.bf16 %v832, %v831
        %v837 = vunpack.c.l.b16 %v833
        %v838 = vunpack.c.h.b16 %v833
        %v839 = vunpack.c.l.b16 %v834
        %v840 = vunpack.c.h.b16 %v834
        %v841 = vpack.c.b16 %v837, %v837
        %v842 = vpack.c.b16 %v838, %v838
        %v843 = vpack.c.b16 %v839, %v839
        %v844 = vpack.c.b16 %v840, %v840
        %849 = vst [vmem:[%s267] sm:$0xf] %v841
        %850 = vst [vmem:[%s267 + $0x4] sm:$0xf] %v842
        %851 = vst [vmem:[%s267 + $0x8] sm:$0xf] %v843
        %852 = vst [vmem:[%s267 + $0xc] sm:$0xf] %v844
        %s853 = sand.u32 %s148, 1
        %s854 = scalar_lea.sflag [#allocation3], %s853
        %s855 = sand.u32 %s148, 1
        %s856 = smul.addr %s855, 16
        %s857 = scalar_lea.vmem [#allocation2], %s856
        // Predicated region
        $region37: #{tpu_custom_call.1} parent=35 // pred_check
          %p858 = pneg %p158
        $region38: #{tpu_custom_call.1} parent=35 // pred_check_branch
          %860 = sbr.rel (%p858) target = $region40
        $region39: #{tpu_custom_call.1} parent=35 // pred_region
          %s861 = smul.u32 4, %s23
          %s863 = ssub.s32 256, 256
          %864 = vsyncadd %s854, %s863
          %s865 = smul.addr %s22, 8
          %s866 = sadd.s32 %s861, %s865
          %s867 = smul.addr %s866, 64
          %s868 = scalar_lea.hbm %s4, %s867
          %s869 = sshll.u32 %s857, 4
          %s870 = int_to_ptr.vmem [resolvable:$true] %s869
          %875 = dma.vmem_to_hbm [thread:$0]  %s870, 256, %s868, %s854, 64, 64, 4
        $region40: #{tpu_custom_call.1} parent=35 // pred_fallthru
          _
      $region36: #{tpu_custom_call.1} parent=5 // pred_fallthru
        _
      %p876 = scmp.le.s32.totalorder 2, %s13
      // Predicated region
      $region41: #{tpu_custom_call.1} parent=5 // pred_check
        %p877 = pneg %p876
      $region42: #{tpu_custom_call.1} parent=5 // pred_check_branch
        %879 = sbr.rel (%p877) target = $region44
      $region43: #{tpu_custom_call.1} parent=5 // pred_region
        %s880 = ssub.s32 %s13, 2
        // Predicated region
        $region45: #{tpu_custom_call.1} parent=43 // pred_check
          %p881 = pneg %p164
        $region46: #{tpu_custom_call.1} parent=43 // pred_check_branch
          %883 = sbr.rel (%p881) target = $region48
        $region47: #{tpu_custom_call.1} parent=43 // pred_region
          %s884 = sand.u32 %s149, 1
          %s885 = scalar_lea.sflag [#allocation3], %s884
          %s886 = sand.u32 %s149, 1
          %s887 = smul.addr %s886, 16
          %s888 = scalar_lea.vmem [#allocation2], %s887
          %889 = dma.done %s885, 256
        $region48: #{tpu_custom_call.1} parent=43 // pred_fallthru
          _
      $region44: #{tpu_custom_call.1} parent=5 // pred_fallthru
        _
    $region6: #{tpu_custom_call.1} parent=1 // loop_footer
      %s17 = sadd.s32 1, %s13
    $region7: #{tpu_custom_call.1} parent=1 // loop_footer_branch
      %12 = sbr.rel target = $region3
    $region8: #{tpu_custom_call.1} parent=1 // loop_exit
      _
    %890 = vsyncpa [#allocation3], 1
    %s891 = scalar_lea.sflag [#allocation3], 1
    %892 = vsyncpa %s891, 1

</llo_original>
